<compile_context>
chip_gen: v5e
topology: v5e:2x2
jax: 0.10.0
libtpu: 0.0.40
codegen_flags: <defaults>
</compile_context>

<pallas_src>
import functools
import math

import numpy as np

import jax
import jax.numpy as jnp
from jax.experimental import pallas as pl
from jax.experimental.pallas import tpu as pltpu


def _round_up(a, b):
    return ((a + b - 1) // b) * b


def _make_mlp_kernel(n_weights):
    """Fused MLP kernel: n_weights matmuls, ReLU between all but the last."""

    def kernel(*refs):
        x_ref = refs[0]
        w_refs = refs[1:1 + n_weights]
        o_ref = refs[1 + n_weights]

        h = x_ref[...]                                          # bf16, lane-dense
        for i, w_ref in enumerate(w_refs):
            acc = jnp.dot(h, w_ref[...],
                          preferred_element_type=jnp.float32)   # f32 accumulate on MXU
            if i < n_weights - 1:
                acc = jnp.maximum(acc, 0.0)                     # ReLU in f32 (v5e-safe)
                h = acc.astype(jnp.bfloat16)                    # bf16 operand for next pass
            else:
                h = acc
        o_ref[...] = h.astype(o_ref.dtype)                      # unmasked lane-dense store

    return kernel


def fold_mlp_weights(weights_t):
    """One-time weight prep (hoisted out of the per-call forward path).

    weights_t: list of [in, out] f32 matrices (PyTorch Linear weights transposed).

    Returns (w_folded, meta):
      w_folded: tuple of bf16 block-diagonal ("folded") weights, every dim a
                multiple of 128 lanes.
      meta:     (f, d_in, d_out, d_out_pad) static ints.
    """
    dims = [weights_t[0].shape[0]] + [w.shape[1] for w in weights_t]
    d_in, d_out = dims[0], dims[-1]

    # Smallest fold factor that makes the (un-paddable) input dim lane-dense.
    f = 128 // math.gcd(d_in, 128)
    # Hidden / output dims CAN be zero-padded so f * dim is a multiple of 128.
    unit = max(128 // f, 1)
    dims_pad = [d_in] + [_round_up(d, unit) for d in dims[1:]]

    eye_f = jnp.eye(f, dtype=jnp.bfloat16)
    folded = []
    for i, w in enumerate(weights_t):
        w_p = jnp.zeros((dims_pad[i], dims_pad[i + 1]), jnp.bfloat16)
        w_p = w_p.at[:dims[i], :dims[i + 1]].set(w.astype(jnp.bfloat16))
        # Block-diagonal: f copies of w_p along the diagonal; off-diagonal exact zeros.
        folded.append(jnp.kron(eye_f, w_p))
    return tuple(folded), (f, d_in, d_out, dims_pad[-1])


@functools.partial(jax.jit, static_argnames=("meta", "tile_m", "out_dtype"))
def _mlp_forward_folded(x, w_folded, meta, tile_m, out_dtype):
    f, d_in, d_out, d_out_pad = meta
    n = x.shape[0]
    assert x.shape[1] == d_in
    n_w = len(w_folded)

    # bf16 BEFORE padding: one half-width wrapper pass over x (cast + pad fuse under jit).
    # (Matches x.to(torch.float32) semantics; bf16 is the MXU operand quantization.)
    x_bf16 = x.astype(jnp.bfloat16)

    # Pad rows only to the folded sublane multiple (8*f samples), not to tile_m.
    n_pad = _round_up(max(n, 1), 8 * f)
    if n_pad != n:
        x_bf16 = jnp.pad(x_bf16, ((0, n_pad - n), (0, 0)))

    n_fold = n_pad // f
    # Fold f consecutive samples into one lane-dense row: pure row-major reshape.
    x_folded = x_bf16.reshape(n_fold, d_in * f)

    # Folded row tile: big for pipeline efficiency / per-step overhead amortization,
    # clamped so the grid keeps >= 2 steps (v7x has 2 TensorCores on one 'parallel' axis).
    tm_f = max(8, _round_up(tile_m // f, 8))
    tm_f = min(tm_f, max(8, _round_up(pl.cdiv(n_fold, 2), 8)))
    grid = (pl.cdiv(n_fold, tm_f),)         # partial last block OK (rows are independent)

    in_specs = [pl.BlockSpec((tm_f, d_in * f), lambda i: (i, 0))]
    for w in w_folded:
        # Full folded weight resident in VMEM; constant block index -> no per-step re-DMA.
        in_specs.append(pl.BlockSpec(w.shape, lambda i: (0, 0)))
    out_spec = pl.BlockSpec((tm_f, d_out_pad * f), lambda i: (i, 0))

    # Actual MXU flops (folded / block-diagonal) + HBM bytes, advisory for XLA.
    mxu_dims = [d_in * f] + [w.shape[1] for w in w_folded]
    flops = 2 * n_fold * sum(mxu_dims[i] * mxu_dims[i + 1] for i in range(n_w))
    bytes_accessed = int(n_pad * d_in * 2
                         + n_pad * d_out_pad * np.dtype(out_dtype).itemsize
                         + sum(int(w.size) * 2 for w in w_folded))

    out_folded = pl.pallas_call(
        _make_mlp_kernel(n_w),
        out_shape=jax.ShapeDtypeStruct((n_fold, d_out_pad * f), out_dtype),
        grid_spec=pltpu.PrefetchScalarGridSpec(
            num_scalar_prefetch=0,
            grid=grid,
            in_specs=in_specs,
            out_specs=out_spec,
        ),
        compiler_params=pltpu.CompilerParams(
            dimension_semantics=("parallel",)),
        cost_estimate=pl.CostEstimate(flops=flops, transcendentals=0,
                                      bytes_accessed=bytes_accessed),
    )(x_folded, *w_folded)

    # Unfold (row-major reshape), drop padded rows and padded output columns.
    return out_folded.reshape(n_pad, d_out_pad)[:n, :d_out]


def mlp_forward(x, w_folded, meta, *, tile_m=8192, out_dtype=jnp.float32):
    """Fused MLP forward on pre-folded weights (see fold_mlp_weights).

    out_dtype=jnp.bfloat16 halves output HBM traffic; default f32 matches PyTorch.
    """
    return _mlp_forward_folded(x, tuple(w_folded), meta=tuple(int(m) for m in meta),
                               tile_m=int(tile_m), out_dtype=out_dtype)


def init_mlp_weights(key, cfg):
    """Deterministic kaiming_uniform_(nonlinearity='relu') init, bias=False.

    PyTorch Linear weight is [out, in]; we return transposed [in, out] matrices.
    kaiming_uniform: bound = gain * sqrt(3 / fan_in), gain(relu) = sqrt(2).
    """
    dims = ([cfg['n_input_dims']]
            + [cfg['n_neurons']] * cfg['n_hidden_layers']
            + [cfg['n_output_dims']])
    weights_t = []
    for i in range(len(dims) - 1):
        fan_in, fan_out = dims[i], dims[i + 1]
        key, sub = jax.random.split(key)
        bound = math.sqrt(2.0) * math.sqrt(3.0 / fan_in)
        w_t = jax.random.uniform(sub, (fan_in, fan_out),
                                 dtype=jnp.float32,
                                 minval=-bound, maxval=bound)
        weights_t.append(w_t)
    return weights_t


def mlp_reference(x, weights_t, operand_dtype=jnp.float32):
    """Pure-JAX reference matching the PyTorch nn.Sequential forward.

    operand_dtype=jnp.bfloat16 mirrors the kernel's bf16-operand / f32-accumulate path.
    """
    h = x.astype(jnp.float32)
    for i, w in enumerate(weights_t):
        h = jnp.dot(h.astype(operand_dtype), w.astype(operand_dtype),
                    preferred_element_type=jnp.float32)
        if i < len(weights_t) - 1:
            h = jnp.maximum(h, 0.0)
    return h


# TODO(synk): loss_scale only rescales gradients via a full_backward_hook; it has no
# effect on the forward pass and is intentionally not represented here.

if __name__ == "__main__":
    cfg = {
        'n_input_dims': 16,
        'n_neurons': 32,
        'n_hidden_layers': 2,
        'n_output_dims': 8,
    }

    key = jax.random.PRNGKey(0)
    key, xkey = jax.random.split(key)

    # Deliberately NOT a multiple of the tile / fold factor to exercise padding
    # and the partial last grid block.
    N = 2085
    x = jax.random.normal(xkey, (N, cfg['n_input_dims']), dtype=jnp.float32)
    weights_t = init_mlp_weights(key, cfg)

    # One-time weight prep (hoisted out of the per-call path).
    w_folded, meta = fold_mlp_weights(weights_t)

    out = mlp_forward(x, w_folded, meta, tile_m=8192)
    out = jax.block_until_ready(out)
    assert out.shape == (N, cfg['n_output_dims'])

    # Exact-math reference (same bf16 operand quantization, f32 accumulation).
    ref_bf16 = mlp_reference(x, weights_t, operand_dtype=jnp.bfloat16)
    assert jnp.allclose(out, ref_bf16, atol=2e-3, rtol=2e-3), "mismatch vs bf16 reference"

    # Sanity vs. full-f32 reference: bf16 operands cost <~1% relative error.
    ref_f32 = mlp_reference(x, weights_t, operand_dtype=jnp.float32)
    rel = jnp.linalg.norm(out - ref_f32) / jnp.linalg.norm(ref_f32)
    assert rel < 5e-2, f"bf16 drift too large: {rel}"

    print("KERNEL_OK")
</pallas_src>

<mosaic_0001>
module attributes {stable_mosaic.version = 11 : i64} {
  func.func @kernel(%arg0: i32, %arg1: memref<136x128xbf16, #tpu.memory_space<vmem>>, %arg2: memref<128x256xbf16, #tpu.memory_space<vmem>>, %arg3: memref<256x256xbf16, #tpu.memory_space<vmem>>, %arg4: memref<256x128xbf16, #tpu.memory_space<vmem>>, %arg5: memref<136x128xf32, #tpu.memory_space<vmem>>) attributes {dimension_semantics = [#tpu.dimension_semantics<parallel>], iteration_bounds = array<i64: 2>, scalar_prefetch = 0 : i64, scratch_operands = 0 : i64, tpu.core_type = #tpu.core_type<tc>, window_params = [{transform_indices = @transform_0, window_bounds = array<i64: 136, 128>}, {pipeline_mode = #tpu.pipeline_mode<synchronous>, transform_indices = @transform_1, window_bounds = array<i64: 128, 256>}, {pipeline_mode = #tpu.pipeline_mode<synchronous>, transform_indices = @transform_2, window_bounds = array<i64: 256, 256>}, {pipeline_mode = #tpu.pipeline_mode<synchronous>, transform_indices = @transform_3, window_bounds = array<i64: 256, 128>}, {transform_indices = @transform_4, window_bounds = array<i64: 136, 128>}]} {
    %c0 = arith.constant 0 : index
    %c0_0 = arith.constant 0 : index
    %0 = vector.load %arg1[%c0, %c0_0] : memref<136x128xbf16, #tpu.memory_space<vmem>>, vector<136x128xbf16>
    %c0_1 = arith.constant 0 : index
    %c0_2 = arith.constant 0 : index
    %1 = vector.load %arg2[%c0_1, %c0_2] : memref<128x256xbf16, #tpu.memory_space<vmem>>, vector<128x256xbf16>
    %cst = arith.constant dense<0.000000e+00> : vector<136x256xf32>
    %2 = tpu.matmul %0, %1, %cst {dimension_numbers = #tpu.dot_dimension_numbers<[1], [0], [0], [1], [0, 0, 1, 1], [], []>} : vector<136x128xbf16>, vector<128x256xbf16>, vector<136x256xf32> -> vector<136x256xf32>
    %cst_3 = arith.constant 0.000000e+00 : f32
    %3 = vector.broadcast %cst_3 : f32 to vector<136x256xf32>
    %4 = arith.maximumf %2, %3 : vector<136x256xf32>
    %5 = arith.truncf %4 : vector<136x256xf32> to vector<136x256xbf16>
    %c0_4 = arith.constant 0 : index
    %c0_5 = arith.constant 0 : index
    %6 = vector.load %arg3[%c0_4, %c0_5] : memref<256x256xbf16, #tpu.memory_space<vmem>>, vector<256x256xbf16>
    %cst_6 = arith.constant dense<0.000000e+00> : vector<136x256xf32>
    %7 = tpu.matmul %5, %6, %cst_6 {dimension_numbers = #tpu.dot_dimension_numbers<[1], [0], [0], [1], [0, 0, 1, 1], [], []>} : vector<136x256xbf16>, vector<256x256xbf16>, vector<136x256xf32> -> vector<136x256xf32>
    %cst_7 = arith.constant 0.000000e+00 : f32
    %8 = vector.broadcast %cst_7 : f32 to vector<136x256xf32>
    %9 = arith.maximumf %7, %8 : vector<136x256xf32>
    %10 = arith.truncf %9 : vector<136x256xf32> to vector<136x256xbf16>
    %c0_8 = arith.constant 0 : index
    %c0_9 = arith.constant 0 : index
    %11 = vector.load %arg4[%c0_8, %c0_9] : memref<256x128xbf16, #tpu.memory_space<vmem>>, vector<256x128xbf16>
    %cst_10 = arith.constant dense<0.000000e+00> : vector<136x128xf32>
    %12 = tpu.matmul %10, %11, %cst_10 {dimension_numbers = #tpu.dot_dimension_numbers<[1], [0], [0], [1], [0, 0, 1, 1], [], []>} : vector<136x256xbf16>, vector<256x128xbf16>, vector<136x128xf32> -> vector<136x128xf32>
    %c0_11 = arith.constant 0 : index
    %c0_12 = arith.constant 0 : index
    %13 = vector.load %arg5[%c0_11, %c0_12] : memref<136x128xf32, #tpu.memory_space<vmem>>, vector<136x128xf32>
    tpu.vector_store %arg5[%c0_11, %c0_12], %12 {strides = array<i32>} : memref<136x128xf32, #tpu.memory_space<vmem>>, vector<136x128xf32>,
    return
  }
  func.func @transform_0(%arg0: i32) -> (i32, i32) {
    %c0_i32 = arith.constant 0 : i32
    %c0_i32_0 = arith.constant 0 : i32
    return %arg0, %c0_i32 : i32, i32
  }
  func.func @transform_1(%arg0: i32) -> (i32, i32) {
    %c0_i32 = arith.constant 0 : i32
    %c0_i32_0 = arith.constant 0 : i32
    %c0_i32_1 = arith.constant 0 : i32
    return %c0_i32, %c0_i32_0 : i32, i32
  }
  func.func @transform_2(%arg0: i32) -> (i32, i32) {
    %c0_i32 = arith.constant 0 : i32
    %c0_i32_0 = arith.constant 0 : i32
    %c0_i32_1 = arith.constant 0 : i32
    return %c0_i32, %c0_i32_0 : i32, i32
  }
  func.func @transform_3(%arg0: i32) -> (i32, i32) {
    %c0_i32 = arith.constant 0 : i32
    %c0_i32_0 = arith.constant 0 : i32
    %c0_i32_1 = arith.constant 0 : i32
    return %c0_i32, %c0_i32_0 : i32, i32
  }
  func.func @transform_4(%arg0: i32) -> (i32, i32) {
    %c0_i32 = arith.constant 0 : i32
    %c0_i32_0 = arith.constant 0 : i32
    return %arg0, %c0_i32 : i32, i32
  }
}

</mosaic_0001>

<llo_original>
// kernel: _mlp_forward_folded.1
$region0: #{_mlp_forward_folded.1}
  #allocation0 [shape = 'u32[]', space=smem, size = 0x4, offset = 0x4, fixed_abs, tag = 'smem constant byte address 0x4 - core index']
  #allocation1 [shape = 'u32[72,128]{1,0:T(1,128)}', space=vmem, size = 0x9000, scoped, tag = 'internal scratch']
  %s0 = inlined_call_operand.vmem [shape: bf16[264,128], index: 0, kind: input, shape index: {}]
  %s1 = inlined_call_operand.vmem [shape: bf16[128,256], index: 1, kind: input, shape index: {}]
  %s2 = inlined_call_operand.vmem [shape: bf16[256,256], index: 2, kind: input, shape index: {}]
  %s3 = inlined_call_operand.vmem [shape: bf16[256,128], index: 3, kind: input, shape index: {}]
  %s4 = inlined_call_operand.vmem [shape: f32[264,128], index: 4, kind: output, shape index: {}]
  %s5 = sld [smem:[#allocation0]]
  $region97: #{_mlp_forward_folded.1} parent=0
    _
  %s7 = ssub.s32 1, %s5
  %s8 = scalar_select 0, %s7, %s5
  $region1: #{_mlp_forward_folded.1} parent=0
    #allocation2 [shape = 'u8[139264]{0}', space=vmem, size = 0x22000, scoped, tag = 'output window, operand 0']
    loop: start=0, step=1, limit=4
    $region2: #{_mlp_forward_folded.1} parent=1 // loop_pre_header
      _
    $region3: #{_mlp_forward_folded.1} parent=1 // loop_header
      %s10 = sphi 0, %s14
      %p11 = scmp.ge.s32.totalorder %s10, 4
      %s20 = sphi 0, %s22
      %s23 = sphi 0, %s20
      %s24 = sphi 0, %s23
      %s40 = sphi 0, %s24
      %s44 = sphi 0, %s44
      %s46 = sphi 0, %s44
      %s47 = sphi 0, %s46
      %s61 = sphi 0, %s47
      %s65 = sphi 0, %s65
      %s67 = sphi 0, %s65
      %s68 = sphi 0, %s67
      %s82 = sphi 0, %s68
      %s86 = sphi 0, %s86
      %s88 = sphi 0, %s86
      %s89 = sphi 0, %s88
      %s103 = sphi 0, %s89
      %s109 = sphi 0, %s111
      %s112 = sphi 0, %s109
      %s113 = sphi 0, %s112
      %s129 = sphi 0, %s113
    $region4: #{_mlp_forward_folded.1} parent=1 // loop_header_branch
      %13 = sbr.rel (%p11) target = $region8
    $region5: #{_mlp_forward_folded.1} parent=1 // loop_body
      %s15 = ssub.s32 %s10, 1
      %s16 = ssub.s32 %s10, 2
      %s17 = sadd.s32 %s10, 1
      %s18 = ssub.s32 %s10, %s17
      %p19 = scmp.eq.s32.totalorder %s18, 0
      %s21 = sadd.s32 %s20, 1
      %s22 = scalar_select %p19, %s20, %s21
      %p25 = pneg %p19
      %p26 = scmp.eq.s32.totalorder %s10, 1
      %p27 = por %p25, %p26
      %p28 = scmp.ne.s32.totalorder %s20, %s23
      %p29 = scmp.eq.s32.totalorder %s10, 0
      %p30 = por %p28, %p29
      %p31 = scmp.ne.s32.totalorder %s20, %s23
      %p32 = scmp.eq.s32.totalorder %s15, 1
      %p33 = por %p31, %p32
      %p34 = scmp.ne.s32.totalorder %s23, %s24
      %p35 = scmp.eq.s32.totalorder %s15, 0
      %p36 = por %p34, %p35
      %p37 = scmp.ne.s32.totalorder %s23, %s24
      %p38 = scmp.eq.s32.totalorder %s16, 1
      %p39 = por %p37, %p38
      %p41 = scmp.ne.s32.totalorder %s24, %s40
      %p42 = scmp.eq.s32.totalorder %s16, 0
      %p43 = por %p41, %p42
      %s45 = sadd.s32 %s44, 1
      %p48 = scmp.eq.s32.totalorder %s10, 1
      %p49 = scmp.ne.s32.totalorder %s44, %s46
      %p50 = scmp.eq.s32.totalorder %s10, 0
      %p51 = por %p49, %p50
      %p52 = scmp.ne.s32.totalorder %s44, %s46
      %p53 = scmp.eq.s32.totalorder %s15, 1
      %p54 = por %p52, %p53
      %p55 = scmp.ne.s32.totalorder %s46, %s47
      %p56 = scmp.eq.s32.totalorder %s15, 0
      %p57 = por %p55, %p56
      %p58 = scmp.ne.s32.totalorder %s46, %s47
      %p59 = scmp.eq.s32.totalorder %s16, 1
      %p60 = por %p58, %p59
      %p62 = scmp.ne.s32.totalorder %s47, %s61
      %p63 = scmp.eq.s32.totalorder %s16, 0
      %p64 = por %p62, %p63
      %s66 = sadd.s32 %s65, 1
      %p69 = scmp.eq.s32.totalorder %s10, 1
      %p70 = scmp.ne.s32.totalorder %s65, %s67
      %p71 = scmp.eq.s32.totalorder %s10, 0
      %p72 = por %p70, %p71
      %p73 = scmp.ne.s32.totalorder %s65, %s67
      %p74 = scmp.eq.s32.totalorder %s15, 1
      %p75 = por %p73, %p74
      %p76 = scmp.ne.s32.totalorder %s67, %s68
      %p77 = scmp.eq.s32.totalorder %s15, 0
      %p78 = por %p76, %p77
      %p79 = scmp.ne.s32.totalorder %s67, %s68
      %p80 = scmp.eq.s32.totalorder %s16, 1
      %p81 = por %p79, %p80
      %p83 = scmp.ne.s32.totalorder %s68, %s82
      %p84 = scmp.eq.s32.totalorder %s16, 0
      %p85 = por %p83, %p84
      %s87 = sadd.s32 %s86, 1
      %p90 = scmp.eq.s32.totalorder %s10, 1
      %p91 = scmp.ne.s32.totalorder %s86, %s88
      %p92 = scmp.eq.s32.totalorder %s10, 0
      %p93 = por %p91, %p92
      %p94 = scmp.ne.s32.totalorder %s86, %s88
      %p95 = scmp.eq.s32.totalorder %s15, 1
      %p96 = por %p94, %p95
      %p97 = scmp.ne.s32.totalorder %s88, %s89
      %p98 = scmp.eq.s32.totalorder %s15, 0
      %p99 = por %p97, %p98
      %p100 = scmp.ne.s32.totalorder %s88, %s89
      %p101 = scmp.eq.s32.totalorder %s16, 1
      %p102 = por %p100, %p101
      %p104 = scmp.ne.s32.totalorder %s89, %s103
      %p105 = scmp.eq.s32.totalorder %s16, 0
      %p106 = por %p104, %p105
      %s107 = ssub.s32 %s10, %s17
      %p108 = scmp.eq.s32.totalorder %s107, 0
      %s110 = sadd.s32 %s109, 1
      %s111 = scalar_select %p108, %s109, %s110
      %p114 = pneg %p108
      %p115 = scmp.eq.s32.totalorder %s10, 1
      %p116 = por %p114, %p115
      %p117 = scmp.ne.s32.totalorder %s109, %s112
      %p118 = scmp.eq.s32.totalorder %s10, 0
      %p119 = por %p117, %p118
      %p120 = scmp.ne.s32.totalorder %s109, %s112
      %p121 = scmp.eq.s32.totalorder %s15, 1
      %p122 = por %p120, %p121
      %p123 = scmp.ne.s32.totalorder %s112, %s113
      %p124 = scmp.eq.s32.totalorder %s15, 0
      %p125 = por %p123, %p124
      %p126 = scmp.ne.s32.totalorder %s112, %s113
      %p127 = scmp.eq.s32.totalorder %s16, 1
      %p128 = por %p126, %p127
      %p130 = scmp.ne.s32.totalorder %s113, %s129
      %p131 = scmp.eq.s32.totalorder %s16, 0
      %p132 = por %p130, %p131
      %p133 = scmp.le.s32.totalorder 1, %s10
      %p134 = scmp.lt.s32.totalorder %s10, 3
      %p135 = pnand %p133, %p134
      %p136 = pneg %p135
      // Predicated region
      $region9: #{_mlp_forward_folded.1} parent=5 // pred_check
        _
      $region10: #{_mlp_forward_folded.1} parent=5 // pred_check_branch
        %138 = sbr.rel (%p135) target = $region12
      $region11: #{_mlp_forward_folded.1} parent=5 // pred_region
        %s139 = ssub.s32 %s10, 1
        // Predicated region
        $region13: #{_mlp_forward_folded.1} parent=11 // pred_check
          %p140 = pneg %p57
        $region14: #{_mlp_forward_folded.1} parent=11 // pred_check_branch
          %142 = sbr.rel (%p140) target = $region16
        $region15: #{_mlp_forward_folded.1} parent=11 // pred_region
          _
        $region16: #{_mlp_forward_folded.1} parent=11 // pred_fallthru
          _
        // Predicated region
        $region17: #{_mlp_forward_folded.1} parent=11 // pred_check
          %p143 = pneg %p78
        $region18: #{_mlp_forward_folded.1} parent=11 // pred_check_branch
          %145 = sbr.rel (%p143) target = $region20
        $region19: #{_mlp_forward_folded.1} parent=11 // pred_region
          _
        $region20: #{_mlp_forward_folded.1} parent=11 // pred_fallthru
          _
        // Predicated region
        $region21: #{_mlp_forward_folded.1} parent=11 // pred_check
          %p146 = pneg %p99
        $region22: #{_mlp_forward_folded.1} parent=11 // pred_check_branch
          %148 = sbr.rel (%p146) target = $region24
        $region23: #{_mlp_forward_folded.1} parent=11 // pred_region
          _
        $region24: #{_mlp_forward_folded.1} parent=11 // pred_fallthru
          _
      $region12: #{_mlp_forward_folded.1} parent=5 // pred_fallthru
        _
      %p149 = scmp.lt.s32.totalorder %s10, 2
      // Predicated region
      $region25: #{_mlp_forward_folded.1} parent=5 // pred_check
        %p150 = pneg %p149
      $region26: #{_mlp_forward_folded.1} parent=5 // pred_check_branch
        %152 = sbr.rel (%p150) target = $region28
      $region27: #{_mlp_forward_folded.1} parent=5 // pred_region
        // Predicated region
        $region29: #{_mlp_forward_folded.1} parent=27 // pred_check
          %p153 = pneg %p30
        $region30: #{_mlp_forward_folded.1} parent=27 // pred_check_branch
          %155 = sbr.rel (%p153) target = $region32
        $region31: #{_mlp_forward_folded.1} parent=27 // pred_region
          %s156 = smul.u32 17, %s10
          %s157 = ssub.s32 33, %s156
          %p158 = scmp.lt.s32.totalorder %s157, 17
          %s159 = scalar_select %p158, %s157, 17
          %s160 = smul.u32 4, %s159
          %p161 = scmp.lt.s32.totalorder %s156, 32
          %s162 = scalar_select %p161, %s156, 32
          %s163 = smul.addr %s162, 4
          %s164 = scalar_lea.vmem %s0, %s163
          %s165 = smul.u32 17, %s10
          %s166 = ssub.s32 33, %s165
          %p167 = scmp.lt.s32.totalorder %s166, 17
          %s168 = scalar_select %p167, %s166, 17
          %s169 = smul.u32 4, %s168
        $region32: #{_mlp_forward_folded.1} parent=27 // pred_fallthru
          _
      $region28: #{_mlp_forward_folded.1} parent=5 // pred_fallthru
        _
      %p170 = scmp.le.s32.totalorder 1, %s10
      %p171 = scmp.lt.s32.totalorder %s10, 3
      %p172 = pnand %p170, %p171
      %p173 = pneg %p172
      // Predicated region
      $region33: #{_mlp_forward_folded.1} parent=5 // pred_check
        _
      $region34: #{_mlp_forward_folded.1} parent=5 // pred_check_branch
        %175 = sbr.rel (%p172) target = $region36
      $region35: #{_mlp_forward_folded.1} parent=5 // pred_region
        %s176 = ssub.s32 %s10, 1
        %s177 = smul.u32 17, %s15
        %s178 = ssub.s32 33, %s177
        %p179 = scmp.lt.s32.totalorder %s178, 17
        %s180 = scalar_select %p179, %s178, 17
        %s181 = smul.u32 4, %s180
        %p182 = scmp.lt.s32.totalorder %s177, 32
        %s183 = scalar_select %p182, %s177, 32
        %s184 = smul.addr %s183, 4
        %s185 = scalar_lea.vmem %s0, %s184
        %p186 = pneg %p36
        %p187 = pneg %p33
        %p188 = pneg %p57
        %p189 = pneg %p54
        %p190 = pneg %p78
        %p191 = pneg %p75
        %p192 = pneg %p99
        %p193 = pneg %p96
        %p194 = pneg %p125
        %p195 = pneg %p122
        %s196 = sand.u32 %s112, 1
        %s197 = sand.u32 %s112, 1
        %s198 = smul.addr %s197, 136
        %s199 = scalar_lea.vmem [#allocation2], %s198
        %s200 = smul.u32 17, %s15
        %s201 = ssub.s32 33, %s200
        %p202 = scmp.lt.s32.totalorder %s201, 17
        %s203 = scalar_select %p202, %s201, 17
        %s204 = smul.u32 4, %s203
        %p205 = scmp.lt.s32.totalorder %s200, 32
        %s206 = scalar_select %p205, %s200, 32
        %s207 = smul.addr %s206, 4
        %s208 = scalar_lea.vmem %s0, %s207
        %s209 = smul.u32 17, %s15
        %s210 = ssub.s32 33, %s209
        %p211 = scmp.lt.s32.totalorder %s210, 17
        %s212 = scalar_select %p211, %s210, 17
        %s213 = smul.u32 4, %s212
        %s214 = smul.u32 17, %s15
        %s215 = ssub.s32 33, %s214
        %p216 = scmp.lt.s32.totalorder %s215, 17
        %s217 = scalar_select %p216, %s215, 17
        %s218 = smul.u32 8, %s217
        %v219 = vld [vmem:[%s208] sm:$0xf]
        %v220 = vld [vmem:[%s208 + $0x4] sm:$0xf]
        %v221 = vld [vmem:[%s208 + $0x8] sm:$0xf]
        %v222 = vld [vmem:[%s208 + $0xc] sm:$0xf]
        %v223 = vld [vmem:[%s208 + $0x10] sm:$0xf]
        %v224 = vld [vmem:[%s208 + $0x14] sm:$0xf]
        %v225 = vld [vmem:[%s208 + $0x18] sm:$0xf]
        %v226 = vld [vmem:[%s208 + $0x1c] sm:$0xf]
        %v227 = vld [vmem:[%s208 + $0x20] sm:$0xf]
        %v228 = vld [vmem:[%s208 + $0x24] sm:$0xf]
        %v229 = vld [vmem:[%s208 + $0x28] sm:$0xf]
        %v230 = vld [vmem:[%s208 + $0x2c] sm:$0xf]
        %v231 = vld [vmem:[%s208 + $0x30] sm:$0xf]
        %v232 = vld [vmem:[%s208 + $0x34] sm:$0xf]
        %v233 = vld [vmem:[%s208 + $0x38] sm:$0xf]
        %v234 = vld [vmem:[%s208 + $0x3c] sm:$0xf]
        %v235 = vld [vmem:[%s208 + $0x40] sm:$0xf]
        %v236 = vld [vmem:[%s1] sm:$0xff]
        %v237 = vld [vmem:[%s1 + $0x8] sm:$0xff]
        %v238 = vld [vmem:[%s1 + $0x10] sm:$0xff]
        %v239 = vld [vmem:[%s1 + $0x18] sm:$0xff]
        %v240 = vld [vmem:[%s1 + $0x20] sm:$0xff]
        %v241 = vld [vmem:[%s1 + $0x28] sm:$0xff]
        %v242 = vld [vmem:[%s1 + $0x30] sm:$0xff]
        %v243 = vld [vmem:[%s1 + $0x38] sm:$0xff]
        %v244 = vld [vmem:[%s1 + $0x40] sm:$0xff]
        %v245 = vld [vmem:[%s1 + $0x48] sm:$0xff]
        %v246 = vld [vmem:[%s1 + $0x50] sm:$0xff]
        %v247 = vld [vmem:[%s1 + $0x58] sm:$0xff]
        %v248 = vld [vmem:[%s1 + $0x60] sm:$0xff]
        %v249 = vld [vmem:[%s1 + $0x68] sm:$0xff]
        %v250 = vld [vmem:[%s1 + $0x70] sm:$0xff]
        %v251 = vld [vmem:[%s1 + $0x78] sm:$0xff]
        %v269 = vunpack.c.l.b16 %v219
        %v270 = vunpack.c.l.b16 %v220
        %v271 = vunpack.c.l.b16 %v221
        %v272 = vunpack.c.l.b16 %v222
        %v273 = vunpack.c.l.b16 %v223
        %v274 = vunpack.c.l.b16 %v224
        %v275 = vunpack.c.l.b16 %v225
        %v276 = vunpack.c.l.b16 %v226
        %v277 = vunpack.c.l.b16 %v227
        %v278 = vunpack.c.l.b16 %v228
        %v279 = vunpack.c.l.b16 %v229
        %v280 = vunpack.c.l.b16 %v230
        %v281 = vunpack.c.l.b16 %v231
        %v282 = vunpack.c.l.b16 %v232
        %v283 = vunpack.c.l.b16 %v233
        %v284 = vunpack.c.l.b16 %v234
        %v285 = vunpack.c.l.b16 %v235
        %v286 = vpack.c.b16 %v270, %v269
        %v287 = vpack.c.b16 %v272, %v271
        %v288 = vpack.c.b16 %v274, %v273
        %v289 = vpack.c.b16 %v276, %v275
        %v290 = vpack.c.b16 %v278, %v277
        %v291 = vpack.c.b16 %v280, %v279
        %v292 = vpack.c.b16 %v282, %v281
        %v293 = vpack.c.b16 %v284, %v283
        %v294 = vpack.c.b16 %v285, %v285
        %v320 = vunpack.c.l.b16 %v236
        %v321 = vunpack.c.h.b16 %v236
        %v322 = vunpack.c.l.b16 %v237
        %v323 = vunpack.c.h.b16 %v237
        %v324 = vunpack.c.l.b16 %v238
        %v325 = vunpack.c.h.b16 %v238
        %v326 = vunpack.c.l.b16 %v239
        %v327 = vunpack.c.h.b16 %v239
        %v328 = vunpack.c.l.b16 %v240
        %v329 = vunpack.c.h.b16 %v240
        %v330 = vunpack.c.l.b16 %v241
        %v331 = vunpack.c.h.b16 %v241
        %v332 = vunpack.c.l.b16 %v242
        %v333 = vunpack.c.h.b16 %v242
        %v334 = vunpack.c.l.b16 %v243
        %v335 = vunpack.c.h.b16 %v243
        %v336 = vunpack.c.l.b16 %v244
        %v337 = vunpack.c.h.b16 %v244
        %v338 = vunpack.c.l.b16 %v245
        %v339 = vunpack.c.h.b16 %v245
        %v340 = vunpack.c.l.b16 %v246
        %v341 = vunpack.c.h.b16 %v246
        %v342 = vunpack.c.l.b16 %v247
        %v343 = vunpack.c.h.b16 %v247
        %v344 = vunpack.c.l.b16 %v248
        %v345 = vunpack.c.h.b16 %v248
        %v346 = vunpack.c.l.b16 %v249
        %v347 = vunpack.c.h.b16 %v249
        %v348 = vunpack.c.l.b16 %v250
        %v349 = vunpack.c.h.b16 %v250
        %v350 = vunpack.c.l.b16 %v251
        %v351 = vunpack.c.h.b16 %v251
        %v352 = vpack.c.b16 %v322, %v320
        %v353 = vpack.c.b16 %v323, %v321
        %v354 = vpack.c.b16 %v326, %v324
        %v355 = vpack.c.b16 %v327, %v325
        %v356 = vpack.c.b16 %v330, %v328
        %v357 = vpack.c.b16 %v331, %v329
        %v358 = vpack.c.b16 %v334, %v332
        %v359 = vpack.c.b16 %v335, %v333
        %v360 = vpack.c.b16 %v338, %v336
        %v361 = vpack.c.b16 %v339, %v337
        %v362 = vpack.c.b16 %v342, %v340
        %v363 = vpack.c.b16 %v343, %v341
        %v364 = vpack.c.b16 %v346, %v344
        %v365 = vpack.c.b16 %v347, %v345
        %v366 = vpack.c.b16 %v350, %v348
        %v367 = vpack.c.b16 %v351, %v349
        %384 = vmatpush.bf16.msra.mxu0 %v366
        %385 = vmatpush.bf16.msra.mxu0 %v364
        %386 = vmatpush.bf16.msra.mxu0 %v362
        %387 = vmatpush.bf16.msra.mxu0 %v360
        %388 = vmatpush.bf16.msra.mxu0 %v358
        %389 = vmatpush.bf16.msra.mxu0 %v356
        %390 = vmatpush.bf16.msra.mxu0 %v354
        %391 = vmatpush.bf16.msra.mxu0 %v352
        %392 = vmatmul.bf16.gmra.mxu0 %v286
        %v393 = vpop.f32.mrf.mxu0
        %v394 = vadd.f32 0.0, %v393
        %v395 = vpop.f32.mrf.mxu0
        %v396 = vadd.f32 0.0, %v395
        %397 = vmatmul.bf16.gmra.mxu0 %v287
        %v398 = vpop.f32.mrf.mxu0
        %v399 = vadd.f32 0.0, %v398
        %v400 = vpop.f32.mrf.mxu0
        %v401 = vadd.f32 0.0, %v400
        %402 = vmatmul.bf16.gmra.mxu0 %v288
        %v403 = vpop.f32.mrf.mxu0
        %v404 = vadd.f32 0.0, %v403
        %v405 = vpop.f32.mrf.mxu0
        %v406 = vadd.f32 0.0, %v405
        %407 = vmatmul.bf16.gmra.mxu0 %v289
        %v408 = vpop.f32.mrf.mxu0
        %v409 = vadd.f32 0.0, %v408
        %v410 = vpop.f32.mrf.mxu0
        %v411 = vadd.f32 0.0, %v410
        %412 = vmatmul.bf16.gmra.mxu0 %v290
        %v413 = vpop.f32.mrf.mxu0
        %v414 = vadd.f32 0.0, %v413
        %v415 = vpop.f32.mrf.mxu0
        %v416 = vadd.f32 0.0, %v415
        %417 = vmatmul.bf16.gmra.mxu0 %v291
        %v418 = vpop.f32.mrf.mxu0
        %v419 = vadd.f32 0.0, %v418
        %v420 = vpop.f32.mrf.mxu0
        %v421 = vadd.f32 0.0, %v420
        %422 = vmatmul.bf16.gmra.mxu0 %v292
        %v423 = vpop.f32.mrf.mxu0
        %v424 = vadd.f32 0.0, %v423
        %v425 = vpop.f32.mrf.mxu0
        %v426 = vadd.f32 0.0, %v425
        %427 = vmatmul.bf16.gmra.mxu0 %v293
        %v428 = vpop.f32.mrf.mxu0
        %v429 = vadd.f32 0.0, %v428
        %v430 = vpop.f32.mrf.mxu0
        %v431 = vadd.f32 0.0, %v430
        %432 = vmatmul.bf16.gmra.mxu0 %v294
        %v433 = vpop.f32.mrf.mxu0
        %v434 = vadd.f32 0.0, %v433
        %v435 = vpop.f32.mrf.mxu0
        %436 = vdwg.mxu0
        %437 = vmatpush.bf16.msra.mxu0 %v367
        %438 = vmatpush.bf16.msra.mxu0 %v365
        %439 = vmatpush.bf16.msra.mxu0 %v363
        %440 = vmatpush.bf16.msra.mxu0 %v361
        %441 = vmatpush.bf16.msra.mxu0 %v359
        %442 = vmatpush.bf16.msra.mxu0 %v357
        %443 = vmatpush.bf16.msra.mxu0 %v355
        %444 = vmatpush.bf16.msra.mxu0 %v353
        %445 = vmatmul.bf16.gmra.mxu0 %v286
        %v446 = vpop.f32.mrf.mxu0
        %v447 = vadd.f32 0.0, %v446
        %v448 = vpop.f32.mrf.mxu0
        %v449 = vadd.f32 0.0, %v448
        %450 = vmatmul.bf16.gmra.mxu0 %v287
        %v451 = vpop.f32.mrf.mxu0
        %v452 = vadd.f32 0.0, %v451
        %v453 = vpop.f32.mrf.mxu0
        %v454 = vadd.f32 0.0, %v453
        %455 = vmatmul.bf16.gmra.mxu0 %v288
        %v456 = vpop.f32.mrf.mxu0
        %v457 = vadd.f32 0.0, %v456
        %v458 = vpop.f32.mrf.mxu0
        %v459 = vadd.f32 0.0, %v458
        %460 = vmatmul.bf16.gmra.mxu0 %v289
        %v461 = vpop.f32.mrf.mxu0
        %v462 = vadd.f32 0.0, %v461
        %v463 = vpop.f32.mrf.mxu0
        %v464 = vadd.f32 0.0, %v463
        %465 = vmatmul.bf16.gmra.mxu0 %v290
        %v466 = vpop.f32.mrf.mxu0
        %v467 = vadd.f32 0.0, %v466
        %v468 = vpop.f32.mrf.mxu0
        %v469 = vadd.f32 0.0, %v468
        %470 = vmatmul.bf16.gmra.mxu0 %v291
        %v471 = vpop.f32.mrf.mxu0
        %v472 = vadd.f32 0.0, %v471
        %v473 = vpop.f32.mrf.mxu0
        %v474 = vadd.f32 0.0, %v473
        %475 = vmatmul.bf16.gmra.mxu0 %v292
        %v476 = vpop.f32.mrf.mxu0
        %v477 = vadd.f32 0.0, %v476
        %v478 = vpop.f32.mrf.mxu0
        %v479 = vadd.f32 0.0, %v478
        %480 = vmatmul.bf16.gmra.mxu0 %v293
        %v481 = vpop.f32.mrf.mxu0
        %v482 = vadd.f32 0.0, %v481
        %v483 = vpop.f32.mrf.mxu0
        %v484 = vadd.f32 0.0, %v483
        %485 = vmatmul.bf16.gmra.mxu0 %v294
        %v486 = vpop.f32.mrf.mxu0
        %v487 = vadd.f32 0.0, %v486
        %v488 = vpop.f32.mrf.mxu0
        %489 = vdwg.mxu0
        %v490 = vmax.f32 %v394, 0.0
        %v491 = vmax.f32 %v447, 0.0
        %v492 = vmax.f32 %v396, 0.0
        %v493 = vmax.f32 %v449, 0.0
        %v494 = vmax.f32 %v399, 0.0
        %v495 = vmax.f32 %v452, 0.0
        %v496 = vmax.f32 %v401, 0.0
        %v497 = vmax.f32 %v454, 0.0
        %v498 = vmax.f32 %v404, 0.0
        %v499 = vmax.f32 %v457, 0.0
        %v500 = vmax.f32 %v406, 0.0
        %v501 = vmax.f32 %v459, 0.0
        %v502 = vmax.f32 %v409, 0.0
        %v503 = vmax.f32 %v462, 0.0
        %v504 = vmax.f32 %v411, 0.0
        %v505 = vmax.f32 %v464, 0.0
        %v506 = vmax.f32 %v414, 0.0
        %v507 = vmax.f32 %v467, 0.0
        %v508 = vmax.f32 %v416, 0.0
        %v509 = vmax.f32 %v469, 0.0
        %v510 = vmax.f32 %v419, 0.0
        %v511 = vmax.f32 %v472, 0.0
        %v512 = vmax.f32 %v421, 0.0
        %v513 = vmax.f32 %v474, 0.0
        %v514 = vmax.f32 %v424, 0.0
        %v515 = vmax.f32 %v477, 0.0
        %v516 = vmax.f32 %v426, 0.0
        %v517 = vmax.f32 %v479, 0.0
        %v518 = vmax.f32 %v429, 0.0
        %v519 = vmax.f32 %v482, 0.0
        %v520 = vmax.f32 %v431, 0.0
        %v521 = vmax.f32 %v484, 0.0
        %v522 = vmax.f32 %v434, 0.0
        %v523 = vmax.f32 %v487, 0.0
        %v524 = vpack.c.bf16 %v492, %v490
        %v525 = vpack.c.bf16 %v493, %v491
        %v526 = vpack.c.bf16 %v496, %v494
        %v527 = vpack.c.bf16 %v497, %v495
        %v528 = vpack.c.bf16 %v500, %v498
        %v529 = vpack.c.bf16 %v501, %v499
        %v530 = vpack.c.bf16 %v504, %v502
        %v531 = vpack.c.bf16 %v505, %v503
        %v532 = vpack.c.bf16 %v508, %v506
        %v533 = vpack.c.bf16 %v509, %v507
        %v534 = vpack.c.bf16 %v512, %v510
        %v535 = vpack.c.bf16 %v513, %v511
        %v536 = vpack.c.bf16 %v516, %v514
        %v537 = vpack.c.bf16 %v517, %v515
        %v538 = vpack.c.bf16 %v520, %v518
        %v539 = vpack.c.bf16 %v521, %v519
        %v540 = vpack.c.bf16 %v522, %v522
        %v541 = vpack.c.bf16 %v523, %v523
        %v542 = vld [vmem:[%s2] sm:$0xff]
        %v543 = vld [vmem:[%s2 + $0x8] sm:$0xff]
        %v544 = vld [vmem:[%s2 + $0x10] sm:$0xff]
        %v545 = vld [vmem:[%s2 + $0x18] sm:$0xff]
        %v546 = vld [vmem:[%s2 + $0x20] sm:$0xff]
        %v547 = vld [vmem:[%s2 + $0x28] sm:$0xff]
        %v548 = vld [vmem:[%s2 + $0x30] sm:$0xff]
        %v549 = vld [vmem:[%s2 + $0x38] sm:$0xff]
        %v550 = vld [vmem:[%s2 + $0x40] sm:$0xff]
        %v551 = vld [vmem:[%s2 + $0x48] sm:$0xff]
        %v552 = vld [vmem:[%s2 + $0x50] sm:$0xff]
        %v553 = vld [vmem:[%s2 + $0x58] sm:$0xff]
        %v554 = vld [vmem:[%s2 + $0x60] sm:$0xff]
        %v555 = vld [vmem:[%s2 + $0x68] sm:$0xff]
        %v556 = vld [vmem:[%s2 + $0x70] sm:$0xff]
        %v557 = vld [vmem:[%s2 + $0x78] sm:$0xff]
        %v558 = vld [vmem:[%s2 + $0x80] sm:$0xff]
        %v559 = vld [vmem:[%s2 + $0x88] sm:$0xff]
        %v560 = vld [vmem:[%s2 + $0x90] sm:$0xff]
        %v561 = vld [vmem:[%s2 + $0x98] sm:$0xff]
        %v562 = vld [vmem:[%s2 + $0xa0] sm:$0xff]
        %v563 = vld [vmem:[%s2 + $0xa8] sm:$0xff]
        %v564 = vld [vmem:[%s2 + $0xb0] sm:$0xff]
        %v565 = vld [vmem:[%s2 + $0xb8] sm:$0xff]
        %v566 = vld [vmem:[%s2 + $0xc0] sm:$0xff]
        %v567 = vld [vmem:[%s2 + $0xc8] sm:$0xff]
        %v568 = vld [vmem:[%s2 + $0xd0] sm:$0xff]
        %v569 = vld [vmem:[%s2 + $0xd8] sm:$0xff]
        %v570 = vld [vmem:[%s2 + $0xe0] sm:$0xff]
        %v571 = vld [vmem:[%s2 + $0xe8] sm:$0xff]
        %v572 = vld [vmem:[%s2 + $0xf0] sm:$0xff]
        %v573 = vld [vmem:[%s2 + $0xf8] sm:$0xff]
        %v606 = vunpack.c.l.b16 %v542
        %v607 = vunpack.c.h.b16 %v542
        %v608 = vunpack.c.l.b16 %v543
        %v609 = vunpack.c.h.b16 %v543
        %v610 = vunpack.c.l.b16 %v544
        %v611 = vunpack.c.h.b16 %v544
        %v612 = vunpack.c.l.b16 %v545
        %v613 = vunpack.c.h.b16 %v545
        %v614 = vunpack.c.l.b16 %v546
        %v615 = vunpack.c.h.b16 %v546
        %v616 = vunpack.c.l.b16 %v547
        %v617 = vunpack.c.h.b16 %v547
        %v618 = vunpack.c.l.b16 %v548
        %v619 = vunpack.c.h.b16 %v548
        %v620 = vunpack.c.l.b16 %v549
        %v621 = vunpack.c.h.b16 %v549
        %v622 = vunpack.c.l.b16 %v550
        %v623 = vunpack.c.h.b16 %v550
        %v624 = vunpack.c.l.b16 %v551
        %v625 = vunpack.c.h.b16 %v551
        %v626 = vunpack.c.l.b16 %v552
        %v627 = vunpack.c.h.b16 %v552
        %v628 = vunpack.c.l.b16 %v553
        %v629 = vunpack.c.h.b16 %v553
        %v630 = vunpack.c.l.b16 %v554
        %v631 = vunpack.c.h.b16 %v554
        %v632 = vunpack.c.l.b16 %v555
        %v633 = vunpack.c.h.b16 %v555
        %v634 = vunpack.c.l.b16 %v556
        %v635 = vunpack.c.h.b16 %v556
        %v636 = vunpack.c.l.b16 %v557
        %v637 = vunpack.c.h.b16 %v557
        %v638 = vunpack.c.l.b16 %v558
        %v639 = vunpack.c.h.b16 %v558
        %v640 = vunpack.c.l.b16 %v559
        %v641 = vunpack.c.h.b16 %v559
        %v642 = vunpack.c.l.b16 %v560
        %v643 = vunpack.c.h.b16 %v560
        %v644 = vunpack.c.l.b16 %v561
        %v645 = vunpack.c.h.b16 %v561
        %v646 = vunpack.c.l.b16 %v562
        %v647 = vunpack.c.h.b16 %v562
        %v648 = vunpack.c.l.b16 %v563
        %v649 = vunpack.c.h.b16 %v563
        %v650 = vunpack.c.l.b16 %v564
        %v651 = vunpack.c.h.b16 %v564
        %v652 = vunpack.c.l.b16 %v565
        %v653 = vunpack.c.h.b16 %v565
        %v654 = vunpack.c.l.b16 %v566
        %v655 = vunpack.c.h.b16 %v566
        %v656 = vunpack.c.l.b16 %v567
        %v657 = vunpack.c.h.b16 %v567
        %v658 = vunpack.c.l.b16 %v568
        %v659 = vunpack.c.h.b16 %v568
        %v660 = vunpack.c.l.b16 %v569
        %v661 = vunpack.c.h.b16 %v569
        %v662 = vunpack.c.l.b16 %v570
        %v663 = vunpack.c.h.b16 %v570
        %v664 = vunpack.c.l.b16 %v571
        %v665 = vunpack.c.h.b16 %v571
        %v666 = vunpack.c.l.b16 %v572
        %v667 = vunpack.c.h.b16 %v572
        %v668 = vunpack.c.l.b16 %v573
        %v669 = vunpack.c.h.b16 %v573
        %v670 = vpack.c.b16 %v608, %v606
        %v671 = vpack.c.b16 %v609, %v607
        %v672 = vpack.c.b16 %v612, %v610
        %v673 = vpack.c.b16 %v613, %v611
        %v674 = vpack.c.b16 %v616, %v614
        %v675 = vpack.c.b16 %v617, %v615
        %v676 = vpack.c.b16 %v620, %v618
        %v677 = vpack.c.b16 %v621, %v619
        %v678 = vpack.c.b16 %v624, %v622
        %v679 = vpack.c.b16 %v625, %v623
        %v680 = vpack.c.b16 %v628, %v626
        %v681 = vpack.c.b16 %v629, %v627
        %v682 = vpack.c.b16 %v632, %v630
        %v683 = vpack.c.b16 %v633, %v631
        %v684 = vpack.c.b16 %v636, %v634
        %v685 = vpack.c.b16 %v637, %v635
        %v686 = vpack.c.b16 %v640, %v638
        %v687 = vpack.c.b16 %v641, %v639
        %v688 = vpack.c.b16 %v644, %v642
        %v689 = vpack.c.b16 %v645, %v643
        %v690 = vpack.c.b16 %v648, %v646
        %v691 = vpack.c.b16 %v649, %v647
        %v692 = vpack.c.b16 %v652, %v650
        %v693 = vpack.c.b16 %v653, %v651
        %v694 = vpack.c.b16 %v656, %v654
        %v695 = vpack.c.b16 %v657, %v655
        %v696 = vpack.c.b16 %v660, %v658
        %v697 = vpack.c.b16 %v661, %v659
        %v698 = vpack.c.b16 %v664, %v662
        %v699 = vpack.c.b16 %v665, %v663
        %v700 = vpack.c.b16 %v668, %v666
        %v701 = vpack.c.b16 %v669, %v667
        %734 = vmatpush.bf16.msra.mxu0 %v684
        %735 = vmatpush.bf16.msra.mxu0 %v682
        %736 = vmatpush.bf16.msra.mxu0 %v680
        %737 = vmatpush.bf16.msra.mxu0 %v678
        %738 = vmatpush.bf16.msra.mxu0 %v676
        %739 = vmatpush.bf16.msra.mxu0 %v674
        %740 = vmatpush.bf16.msra.mxu0 %v672
        %741 = vmatpush.bf16.msra.mxu0 %v670
        %742 = vmatmul.bf16.gmra.mxu0 %v524
        %v743 = vpop.f32.mrf.mxu0
        %v744 = vadd.f32 0.0, %v743
        %v745 = vpop.f32.mrf.mxu0
        %v746 = vadd.f32 0.0, %v745
        %747 = vmatmul.bf16.gmra.mxu0 %v526
        %v748 = vpop.f32.mrf.mxu0
        %v749 = vadd.f32 0.0, %v748
        %v750 = vpop.f32.mrf.mxu0
        %v751 = vadd.f32 0.0, %v750
        %752 = vmatmul.bf16.gmra.mxu0 %v528
        %v753 = vpop.f32.mrf.mxu0
        %v754 = vadd.f32 0.0, %v753
        %v755 = vpop.f32.mrf.mxu0
        %v756 = vadd.f32 0.0, %v755
        %757 = vmatmul.bf16.gmra.mxu0 %v530
        %v758 = vpop.f32.mrf.mxu0
        %v759 = vadd.f32 0.0, %v758
        %v760 = vpop.f32.mrf.mxu0
        %v761 = vadd.f32 0.0, %v760
        %762 = vmatmul.bf16.gmra.mxu0 %v532
        %v763 = vpop.f32.mrf.mxu0
        %v764 = vadd.f32 0.0, %v763
        %v765 = vpop.f32.mrf.mxu0
        %v766 = vadd.f32 0.0, %v765
        %767 = vmatmul.bf16.gmra.mxu0 %v534
        %v768 = vpop.f32.mrf.mxu0
        %v769 = vadd.f32 0.0, %v768
        %v770 = vpop.f32.mrf.mxu0
        %v771 = vadd.f32 0.0, %v770
        %772 = vmatmul.bf16.gmra.mxu0 %v536
        %v773 = vpop.f32.mrf.mxu0
        %v774 = vadd.f32 0.0, %v773
        %v775 = vpop.f32.mrf.mxu0
        %v776 = vadd.f32 0.0, %v775
        %777 = vmatmul.bf16.gmra.mxu0 %v538
        %v778 = vpop.f32.mrf.mxu0
        %v779 = vadd.f32 0.0, %v778
        %v780 = vpop.f32.mrf.mxu0
        %v781 = vadd.f32 0.0, %v780
        %782 = vmatmul.bf16.gmra.mxu0 %v540
        %v783 = vpop.f32.mrf.mxu0
        %v784 = vadd.f32 0.0, %v783
        %v785 = vpop.f32.mrf.mxu0
        %786 = vdwg.mxu0
        %787 = vmatpush.bf16.msra.mxu0 %v700
        %788 = vmatpush.bf16.msra.mxu0 %v698
        %789 = vmatpush.bf16.msra.mxu0 %v696
        %790 = vmatpush.bf16.msra.mxu0 %v694
        %791 = vmatpush.bf16.msra.mxu0 %v692
        %792 = vmatpush.bf16.msra.mxu0 %v690
        %793 = vmatpush.bf16.msra.mxu0 %v688
        %794 = vmatpush.bf16.msra.mxu0 %v686
        %795 = vmatmul.bf16.gmra.mxu0 %v525
        %v796 = vpop.f32.mrf.mxu0
        %v797 = vadd.f32 %v744, %v796
        %v798 = vpop.f32.mrf.mxu0
        %v799 = vadd.f32 %v746, %v798
        %800 = vmatmul.bf16.gmra.mxu0 %v527
        %v801 = vpop.f32.mrf.mxu0
        %v802 = vadd.f32 %v749, %v801
        %v803 = vpop.f32.mrf.mxu0
        %v804 = vadd.f32 %v751, %v803
        %805 = vmatmul.bf16.gmra.mxu0 %v529
        %v806 = vpop.f32.mrf.mxu0
        %v807 = vadd.f32 %v754, %v806
        %v808 = vpop.f32.mrf.mxu0
        %v809 = vadd.f32 %v756, %v808
        %810 = vmatmul.bf16.gmra.mxu0 %v531
        %v811 = vpop.f32.mrf.mxu0
        %v812 = vadd.f32 %v759, %v811
        %v813 = vpop.f32.mrf.mxu0
        %v814 = vadd.f32 %v761, %v813
        %815 = vmatmul.bf16.gmra.mxu0 %v533
        %v816 = vpop.f32.mrf.mxu0
        %v817 = vadd.f32 %v764, %v816
        %v818 = vpop.f32.mrf.mxu0
        %v819 = vadd.f32 %v766, %v818
        %820 = vmatmul.bf16.gmra.mxu0 %v535
        %v821 = vpop.f32.mrf.mxu0
        %v822 = vadd.f32 %v769, %v821
        %v823 = vpop.f32.mrf.mxu0
        %v824 = vadd.f32 %v771, %v823
        %825 = vmatmul.bf16.gmra.mxu0 %v537
        %v826 = vpop.f32.mrf.mxu0
        %v827 = vadd.f32 %v774, %v826
        %v828 = vpop.f32.mrf.mxu0
        %v829 = vadd.f32 %v776, %v828
        %830 = vmatmul.bf16.gmra.mxu0 %v539
        %v831 = vpop.f32.mrf.mxu0
        %v832 = vadd.f32 %v779, %v831
        %v833 = vpop.f32.mrf.mxu0
        %v834 = vadd.f32 %v781, %v833
        %835 = vmatmul.bf16.gmra.mxu0 %v541
        %v836 = vpop.f32.mrf.mxu0
        %v837 = vadd.f32 %v784, %v836
        %v838 = vpop.f32.mrf.mxu0
        %839 = vdwg.mxu0
        %840 = vmatpush.bf16.msra.mxu0 %v685
        %841 = vmatpush.bf16.msra.mxu0 %v683
        %842 = vmatpush.bf16.msra.mxu0 %v681
        %843 = vmatpush.bf16.msra.mxu0 %v679
        %844 = vmatpush.bf16.msra.mxu0 %v677
        %845 = vmatpush.bf16.msra.mxu0 %v675
        %846 = vmatpush.bf16.msra.mxu0 %v673
        %847 = vmatpush.bf16.msra.mxu0 %v671
        %848 = vmatmul.bf16.gmra.mxu0 %v524
        %v849 = vpop.f32.mrf.mxu0
        %v850 = vadd.f32 0.0, %v849
        %v851 = vpop.f32.mrf.mxu0
        %v852 = vadd.f32 0.0, %v851
        %853 = vmatmul.bf16.gmra.mxu0 %v526
        %v854 = vpop.f32.mrf.mxu0
        %v855 = vadd.f32 0.0, %v854
        %v856 = vpop.f32.mrf.mxu0
        %v857 = vadd.f32 0.0, %v856
        %858 = vmatmul.bf16.gmra.mxu0 %v528
        %v859 = vpop.f32.mrf.mxu0
        %v860 = vadd.f32 0.0, %v859
        %v861 = vpop.f32.mrf.mxu0
        %v862 = vadd.f32 0.0, %v861
        %863 = vmatmul.bf16.gmra.mxu0 %v530
        %v864 = vpop.f32.mrf.mxu0
        %v865 = vadd.f32 0.0, %v864
        %v866 = vpop.f32.mrf.mxu0
        %v867 = vadd.f32 0.0, %v866
        %868 = vmatmul.bf16.gmra.mxu0 %v532
        %v869 = vpop.f32.mrf.mxu0
        %v870 = vadd.f32 0.0, %v869
        %v871 = vpop.f32.mrf.mxu0
        %v872 = vadd.f32 0.0, %v871
        %873 = vmatmul.bf16.gmra.mxu0 %v534
        %v874 = vpop.f32.mrf.mxu0
        %v875 = vadd.f32 0.0, %v874
        %v876 = vpop.f32.mrf.mxu0
        %v877 = vadd.f32 0.0, %v876
        %878 = vmatmul.bf16.gmra.mxu0 %v536
        %v879 = vpop.f32.mrf.mxu0
        %v880 = vadd.f32 0.0, %v879
        %v881 = vpop.f32.mrf.mxu0
        %v882 = vadd.f32 0.0, %v881
        %883 = vmatmul.bf16.gmra.mxu0 %v538
        %v884 = vpop.f32.mrf.mxu0
        %v885 = vadd.f32 0.0, %v884
        %v886 = vpop.f32.mrf.mxu0
        %v887 = vadd.f32 0.0, %v886
        %888 = vmatmul.bf16.gmra.mxu0 %v540
        %v889 = vpop.f32.mrf.mxu0
        %v890 = vadd.f32 0.0, %v889
        %v891 = vpop.f32.mrf.mxu0
        %892 = vdwg.mxu0
        %893 = vmatpush.bf16.msra.mxu0 %v701
        %894 = vmatpush.bf16.msra.mxu0 %v699
        %895 = vmatpush.bf16.msra.mxu0 %v697
        %896 = vmatpush.bf16.msra.mxu0 %v695
        %897 = vmatpush.bf16.msra.mxu0 %v693
        %898 = vmatpush.bf16.msra.mxu0 %v691
        %899 = vmatpush.bf16.msra.mxu0 %v689
        %900 = vmatpush.bf16.msra.mxu0 %v687
        %901 = vmatmul.bf16.gmra.mxu0 %v525
        %v902 = vpop.f32.mrf.mxu0
        %v903 = vadd.f32 %v850, %v902
        %v904 = vpop.f32.mrf.mxu0
        %v905 = vadd.f32 %v852, %v904
        %906 = vmatmul.bf16.gmra.mxu0 %v527
        %v907 = vpop.f32.mrf.mxu0
        %v908 = vadd.f32 %v855, %v907
        %v909 = vpop.f32.mrf.mxu0
        %v910 = vadd.f32 %v857, %v909
        %911 = vmatmul.bf16.gmra.mxu0 %v529
        %v912 = vpop.f32.mrf.mxu0
        %v913 = vadd.f32 %v860, %v912
        %v914 = vpop.f32.mrf.mxu0
        %v915 = vadd.f32 %v862, %v914
        %916 = vmatmul.bf16.gmra.mxu0 %v531
        %v917 = vpop.f32.mrf.mxu0
        %v918 = vadd.f32 %v865, %v917
        %v919 = vpop.f32.mrf.mxu0
        %v920 = vadd.f32 %v867, %v919
        %921 = vmatmul.bf16.gmra.mxu0 %v533
        %v922 = vpop.f32.mrf.mxu0
        %v923 = vadd.f32 %v870, %v922
        %v924 = vpop.f32.mrf.mxu0
        %v925 = vadd.f32 %v872, %v924
        %926 = vmatmul.bf16.gmra.mxu0 %v535
        %v927 = vpop.f32.mrf.mxu0
        %v928 = vadd.f32 %v875, %v927
        %v929 = vpop.f32.mrf.mxu0
        %v930 = vadd.f32 %v877, %v929
        %931 = vmatmul.bf16.gmra.mxu0 %v537
        %v932 = vpop.f32.mrf.mxu0
        %v933 = vadd.f32 %v880, %v932
        %v934 = vpop.f32.mrf.mxu0
        %v935 = vadd.f32 %v882, %v934
        %936 = vmatmul.bf16.gmra.mxu0 %v539
        %v937 = vpop.f32.mrf.mxu0
        %v938 = vadd.f32 %v885, %v937
        %v939 = vpop.f32.mrf.mxu0
        %v940 = vadd.f32 %v887, %v939
        %941 = vmatmul.bf16.gmra.mxu0 %v541
        %v942 = vpop.f32.mrf.mxu0
        %v943 = vadd.f32 %v890, %v942
        %v944 = vpop.f32.mrf.mxu0
        %945 = vdwg.mxu0
        %v946 = vmax.f32 %v797, 0.0
        %v947 = vmax.f32 %v903, 0.0
        %v948 = vmax.f32 %v799, 0.0
        %v949 = vmax.f32 %v905, 0.0
        %v950 = vmax.f32 %v802, 0.0
        %v951 = vmax.f32 %v908, 0.0
        %v952 = vmax.f32 %v804, 0.0
        %v953 = vmax.f32 %v910, 0.0
        %v954 = vmax.f32 %v807, 0.0
        %v955 = vmax.f32 %v913, 0.0
        %v956 = vmax.f32 %v809, 0.0
        %v957 = vmax.f32 %v915, 0.0
        %v958 = vmax.f32 %v812, 0.0
        %v959 = vmax.f32 %v918, 0.0
        %v960 = vmax.f32 %v814, 0.0
        %v961 = vmax.f32 %v920, 0.0
        %v962 = vmax.f32 %v817, 0.0
        %v963 = vmax.f32 %v923, 0.0
        %v964 = vmax.f32 %v819, 0.0
        %v965 = vmax.f32 %v925, 0.0
        %v966 = vmax.f32 %v822, 0.0
        %v967 = vmax.f32 %v928, 0.0
        %v968 = vmax.f32 %v824, 0.0
        %v969 = vmax.f32 %v930, 0.0
        %v970 = vmax.f32 %v827, 0.0
        %v971 = vmax.f32 %v933, 0.0
        %v972 = vmax.f32 %v829, 0.0
        %v973 = vmax.f32 %v935, 0.0
        %v974 = vmax.f32 %v832, 0.0
        %v975 = vmax.f32 %v938, 0.0
        %v976 = vmax.f32 %v834, 0.0
        %v977 = vmax.f32 %v940, 0.0
        %v978 = vmax.f32 %v837, 0.0
        %v979 = vmax.f32 %v943, 0.0
        %v980 = vpack.c.bf16 %v948, %v946
        %v981 = vpack.c.bf16 %v949, %v947
        %v982 = vpack.c.bf16 %v952, %v950
        %v983 = vpack.c.bf16 %v953, %v951
        %v984 = vpack.c.bf16 %v956, %v954
        %v985 = vpack.c.bf16 %v957, %v955
        %v986 = vpack.c.bf16 %v960, %v958
        %v987 = vpack.c.bf16 %v961, %v959
        %v988 = vpack.c.bf16 %v964, %v962
        %v989 = vpack.c.bf16 %v965, %v963
        %v990 = vpack.c.bf16 %v968, %v966
        %v991 = vpack.c.bf16 %v969, %v967
        %v992 = vpack.c.bf16 %v972, %v970
        %v993 = vpack.c.bf16 %v973, %v971
        %v994 = vpack.c.bf16 %v976, %v974
        %v995 = vpack.c.bf16 %v977, %v975
        %v996 = vpack.c.bf16 %v978, %v978
        %v997 = vpack.c.bf16 %v979, %v979
        %v998 = vld [vmem:[%s3] sm:$0xf]
        %v999 = vld [vmem:[%s3 + $0x4] sm:$0xf]
        %v1000 = vld [vmem:[%s3 + $0x8] sm:$0xf]
        %v1001 = vld [vmem:[%s3 + $0xc] sm:$0xf]
        %v1002 = vld [vmem:[%s3 + $0x10] sm:$0xf]
        %v1003 = vld [vmem:[%s3 + $0x14] sm:$0xf]
        %v1004 = vld [vmem:[%s3 + $0x18] sm:$0xf]
        %v1005 = vld [vmem:[%s3 + $0x1c] sm:$0xf]
        %v1006 = vld [vmem:[%s3 + $0x20] sm:$0xf]
        %v1007 = vld [vmem:[%s3 + $0x24] sm:$0xf]
        %v1008 = vld [vmem:[%s3 + $0x28] sm:$0xf]
        %v1009 = vld [vmem:[%s3 + $0x2c] sm:$0xf]
        %v1010 = vld [vmem:[%s3 + $0x30] sm:$0xf]
        %v1011 = vld [vmem:[%s3 + $0x34] sm:$0xf]
        %v1012 = vld [vmem:[%s3 + $0x38] sm:$0xf]
        %v1013 = vld [vmem:[%s3 + $0x3c] sm:$0xf]
        %v1014 = vld [vmem:[%s3 + $0x40] sm:$0xf]
        %v1015 = vld [vmem:[%s3 + $0x44] sm:$0xf]
        %v1016 = vld [vmem:[%s3 + $0x48] sm:$0xf]
        %v1017 = vld [vmem:[%s3 + $0x4c] sm:$0xf]
        %v1018 = vld [vmem:[%s3 + $0x50] sm:$0xf]
        %v1019 = vld [vmem:[%s3 + $0x54] sm:$0xf]
        %v1020 = vld [vmem:[%s3 + $0x58] sm:$0xf]
        %v1021 = vld [vmem:[%s3 + $0x5c] sm:$0xf]
        %v1022 = vld [vmem:[%s3 + $0x60] sm:$0xf]
        %v1023 = vld [vmem:[%s3 + $0x64] sm:$0xf]
        %v1024 = vld [vmem:[%s3 + $0x68] sm:$0xf]
        %v1025 = vld [vmem:[%s3 + $0x6c] sm:$0xf]
        %v1026 = vld [vmem:[%s3 + $0x70] sm:$0xf]
        %v1027 = vld [vmem:[%s3 + $0x74] sm:$0xf]
        %v1028 = vld [vmem:[%s3 + $0x78] sm:$0xf]
        %v1029 = vld [vmem:[%s3 + $0x7c] sm:$0xf]
        %v1062 = vunpack.c.l.b16 %v998
        %v1063 = vunpack.c.l.b16 %v999
        %v1064 = vunpack.c.l.b16 %v1000
        %v1065 = vunpack.c.l.b16 %v1001
        %v1066 = vunpack.c.l.b16 %v1002
        %v1067 = vunpack.c.l.b16 %v1003
        %v1068 = vunpack.c.l.b16 %v1004
        %v1069 = vunpack.c.l.b16 %v1005
        %v1070 = vunpack.c.l.b16 %v1006
        %v1071 = vunpack.c.l.b16 %v1007
        %v1072 = vunpack.c.l.b16 %v1008
        %v1073 = vunpack.c.l.b16 %v1009
        %v1074 = vunpack.c.l.b16 %v1010
        %v1075 = vunpack.c.l.b16 %v1011
        %v1076 = vunpack.c.l.b16 %v1012
        %v1077 = vunpack.c.l.b16 %v1013
        %v1078 = vunpack.c.l.b16 %v1014
        %v1079 = vunpack.c.l.b16 %v1015
        %v1080 = vunpack.c.l.b16 %v1016
        %v1081 = vunpack.c.l.b16 %v1017
        %v1082 = vunpack.c.l.b16 %v1018
        %v1083 = vunpack.c.l.b16 %v1019
        %v1084 = vunpack.c.l.b16 %v1020
        %v1085 = vunpack.c.l.b16 %v1021
        %v1086 = vunpack.c.l.b16 %v1022
        %v1087 = vunpack.c.l.b16 %v1023
        %v1088 = vunpack.c.l.b16 %v1024
        %v1089 = vunpack.c.l.b16 %v1025
        %v1090 = vunpack.c.l.b16 %v1026
        %v1091 = vunpack.c.l.b16 %v1027
        %v1092 = vunpack.c.l.b16 %v1028
        %v1093 = vunpack.c.l.b16 %v1029
        %v1094 = vpack.c.b16 %v1063, %v1062
        %v1095 = vpack.c.b16 %v1065, %v1064
        %v1096 = vpack.c.b16 %v1067, %v1066
        %v1097 = vpack.c.b16 %v1069, %v1068
        %v1098 = vpack.c.b16 %v1071, %v1070
        %v1099 = vpack.c.b16 %v1073, %v1072
        %v1100 = vpack.c.b16 %v1075, %v1074
        %v1101 = vpack.c.b16 %v1077, %v1076
        %v1102 = vpack.c.b16 %v1079, %v1078
        %v1103 = vpack.c.b16 %v1081, %v1080
        %v1104 = vpack.c.b16 %v1083, %v1082
        %v1105 = vpack.c.b16 %v1085, %v1084
        %v1106 = vpack.c.b16 %v1087, %v1086
        %v1107 = vpack.c.b16 %v1089, %v1088
        %v1108 = vpack.c.b16 %v1091, %v1090
        %v1109 = vpack.c.b16 %v1093, %v1092
        %1126 = vmatpush.bf16.msra.mxu0 %v1101
        %1127 = vmatpush.bf16.msra.mxu0 %v1100
        %1128 = vmatpush.bf16.msra.mxu0 %v1099
        %1129 = vmatpush.bf16.msra.mxu0 %v1098
        %1130 = vmatpush.bf16.msra.mxu0 %v1097
        %1131 = vmatpush.bf16.msra.mxu0 %v1096
        %1132 = vmatpush.bf16.msra.mxu0 %v1095
        %1133 = vmatpush.bf16.msra.mxu0 %v1094
        %1134 = vmatmul.bf16.gmra.mxu0 %v980
        %v1135 = vpop.f32.mrf.mxu0
        %v1136 = vadd.f32 0.0, %v1135
        %v1137 = vpop.f32.mrf.mxu0
        %v1138 = vadd.f32 0.0, %v1137
        %1139 = vmatmul.bf16.gmra.mxu0 %v982
        %v1140 = vpop.f32.mrf.mxu0
        %v1141 = vadd.f32 0.0, %v1140
        %v1142 = vpop.f32.mrf.mxu0
        %v1143 = vadd.f32 0.0, %v1142
        %1144 = vmatmul.bf16.gmra.mxu0 %v984
        %v1145 = vpop.f32.mrf.mxu0
        %v1146 = vadd.f32 0.0, %v1145
        %v1147 = vpop.f32.mrf.mxu0
        %v1148 = vadd.f32 0.0, %v1147
        %1149 = vmatmul.bf16.gmra.mxu0 %v986
        %v1150 = vpop.f32.mrf.mxu0
        %v1151 = vadd.f32 0.0, %v1150
        %v1152 = vpop.f32.mrf.mxu0
        %v1153 = vadd.f32 0.0, %v1152
        %1154 = vmatmul.bf16.gmra.mxu0 %v988
        %v1155 = vpop.f32.mrf.mxu0
        %v1156 = vadd.f32 0.0, %v1155
        %v1157 = vpop.f32.mrf.mxu0
        %v1158 = vadd.f32 0.0, %v1157
        %1159 = vmatmul.bf16.gmra.mxu0 %v990
        %v1160 = vpop.f32.mrf.mxu0
        %v1161 = vadd.f32 0.0, %v1160
        %v1162 = vpop.f32.mrf.mxu0
        %v1163 = vadd.f32 0.0, %v1162
        %1164 = vmatmul.bf16.gmra.mxu0 %v992
        %v1165 = vpop.f32.mrf.mxu0
        %v1166 = vadd.f32 0.0, %v1165
        %v1167 = vpop.f32.mrf.mxu0
        %v1168 = vadd.f32 0.0, %v1167
        %1169 = vmatmul.bf16.gmra.mxu0 %v994
        %v1170 = vpop.f32.mrf.mxu0
        %v1171 = vadd.f32 0.0, %v1170
        %v1172 = vpop.f32.mrf.mxu0
        %v1173 = vadd.f32 0.0, %v1172
        %1174 = vmatmul.bf16.gmra.mxu0 %v996
        %v1175 = vpop.f32.mrf.mxu0
        %v1176 = vadd.f32 0.0, %v1175
        %v1177 = vpop.f32.mrf.mxu0
        %1178 = vdwg.mxu0
        %1179 = vmatpush.bf16.msra.mxu0 %v1109
        %1180 = vmatpush.bf16.msra.mxu0 %v1108
        %1181 = vmatpush.bf16.msra.mxu0 %v1107
        %1182 = vmatpush.bf16.msra.mxu0 %v1106
        %1183 = vmatpush.bf16.msra.mxu0 %v1105
        %1184 = vmatpush.bf16.msra.mxu0 %v1104
        %1185 = vmatpush.bf16.msra.mxu0 %v1103
        %1186 = vmatpush.bf16.msra.mxu0 %v1102
        %1187 = vmatmul.bf16.gmra.mxu0 %v981
        %v1188 = vpop.f32.mrf.mxu0
        %v1189 = vadd.f32 %v1136, %v1188
        %v1190 = vpop.f32.mrf.mxu0
        %v1191 = vadd.f32 %v1138, %v1190
        %1192 = vmatmul.bf16.gmra.mxu0 %v983
        %v1193 = vpop.f32.mrf.mxu0
        %v1194 = vadd.f32 %v1141, %v1193
        %v1195 = vpop.f32.mrf.mxu0
        %v1196 = vadd.f32 %v1143, %v1195
        %1197 = vmatmul.bf16.gmra.mxu0 %v985
        %v1198 = vpop.f32.mrf.mxu0
        %v1199 = vadd.f32 %v1146, %v1198
        %v1200 = vpop.f32.mrf.mxu0
        %v1201 = vadd.f32 %v1148, %v1200
        %1202 = vmatmul.bf16.gmra.mxu0 %v987
        %v1203 = vpop.f32.mrf.mxu0
        %v1204 = vadd.f32 %v1151, %v1203
        %v1205 = vpop.f32.mrf.mxu0
        %v1206 = vadd.f32 %v1153, %v1205
        %1207 = vmatmul.bf16.gmra.mxu0 %v989
        %v1208 = vpop.f32.mrf.mxu0
        %v1209 = vadd.f32 %v1156, %v1208
        %v1210 = vpop.f32.mrf.mxu0
        %v1211 = vadd.f32 %v1158, %v1210
        %1212 = vmatmul.bf16.gmra.mxu0 %v991
        %v1213 = vpop.f32.mrf.mxu0
        %v1214 = vadd.f32 %v1161, %v1213
        %v1215 = vpop.f32.mrf.mxu0
        %v1216 = vadd.f32 %v1163, %v1215
        %1217 = vmatmul.bf16.gmra.mxu0 %v993
        %v1218 = vpop.f32.mrf.mxu0
        %v1219 = vadd.f32 %v1166, %v1218
        %v1220 = vpop.f32.mrf.mxu0
        %v1221 = vadd.f32 %v1168, %v1220
        %1222 = vmatmul.bf16.gmra.mxu0 %v995
        %v1223 = vpop.f32.mrf.mxu0
        %v1224 = vadd.f32 %v1171, %v1223
        %v1225 = vpop.f32.mrf.mxu0
        %v1226 = vadd.f32 %v1173, %v1225
        %1227 = vmatmul.bf16.gmra.mxu0 %v997
        %v1228 = vpop.f32.mrf.mxu0
        %v1229 = vadd.f32 %v1176, %v1228
        %v1230 = vpop.f32.mrf.mxu0
        %1231 = vdwg.mxu0
        %1232 = vst [vmem:[%s199] sm:$0xff] %v1189
        %1233 = vst [vmem:[%s199 + $0x8] sm:$0xff] %v1191
        %1234 = vst [vmem:[%s199 + $0x10] sm:$0xff] %v1194
        %1235 = vst [vmem:[%s199 + $0x18] sm:$0xff] %v1196
        %1236 = vst [vmem:[%s199 + $0x20] sm:$0xff] %v1199
        %1237 = vst [vmem:[%s199 + $0x28] sm:$0xff] %v1201
        %1238 = vst [vmem:[%s199 + $0x30] sm:$0xff] %v1204
        %1239 = vst [vmem:[%s199 + $0x38] sm:$0xff] %v1206
        %1240 = vst [vmem:[%s199 + $0x40] sm:$0xff] %v1209
        %1241 = vst [vmem:[%s199 + $0x48] sm:$0xff] %v1211
        %1242 = vst [vmem:[%s199 + $0x50] sm:$0xff] %v1214
        %1243 = vst [vmem:[%s199 + $0x58] sm:$0xff] %v1216
        %1244 = vst [vmem:[%s199 + $0x60] sm:$0xff] %v1219
        %1245 = vst [vmem:[%s199 + $0x68] sm:$0xff] %v1221
        %1246 = vst [vmem:[%s199 + $0x70] sm:$0xff] %v1224
        %1247 = vst [vmem:[%s199 + $0x78] sm:$0xff] %v1226
        %1248 = vst [vmem:[%s199 + $0x80] sm:$0xff] %v1229
        %s1249 = sand.u32 %s112, 1
        %s1250 = sand.u32 %s112, 1
        %s1251 = smul.addr %s1250, 136
        %s1252 = scalar_lea.vmem [#allocation2], %s1251
        // Predicated region
        $region37: #{_mlp_forward_folded.1} parent=35 // pred_check
          %p1253 = pneg %p122
        $region38: #{_mlp_forward_folded.1} parent=35 // pred_check_branch
          %1255 = sbr.rel (%p1253) target = $region40
        $region39: #{_mlp_forward_folded.1} parent=35 // pred_region
          %s1256 = smul.u32 17, %s15
          %s1257 = ssub.s32 33, %s1256
          %p1258 = scmp.lt.s32.totalorder %s1257, 17
          %s1259 = scalar_select %p1258, %s1257, 17
          %s1260 = smul.u32 8, %s1259
          %p1261 = scmp.ne.s32.totalorder 0, %s1260
          %s1262 = smul.addr %s1256, 8
          %s1263 = scalar_lea.vmem %s4, %s1262
          // Predicated region
          $region41: #{_mlp_forward_folded.1} parent=39 // pred_check
            %p1264 = pneg %p1261
          $region42: #{_mlp_forward_folded.1} parent=39 // pred_check_branch
            %1266 = sbr.rel (%p1264) target = $region44
          $region43: #{_mlp_forward_folded.1} parent=39 // pred_region
            // Predicated region
            $region45: #{_mlp_forward_folded.1} parent=43 // pred_check
              _
            $region46: #{_mlp_forward_folded.1} parent=43 // pred_check_branch
              %1268 = sbr.rel (0) target = $region48
            $region47: #{_mlp_forward_folded.1} parent=43 // pred_region
              // Predicated region
              $region67: #{_mlp_forward_folded.1} parent=47 // pred_check
                _
              $region68: #{_mlp_forward_folded.1} parent=47 // pred_check_branch
                %1351 = sbr.rel (0) target = $region70
              $region69: #{_mlp_forward_folded.1} parent=47 // pred_region
                %s1352 = sdiv.u32.pop %s1259, 17
                %s1353 = srem.u32.pop %s1259, 17
                // While loop
                $region71: #{_mlp_forward_folded.1} parent=69 // loop_pre_header
                  _
                $region72: #{_mlp_forward_folded.1} parent=69 // loop_header
                  %s1355 = sphi 0, %s1357
                  %p1356 = scmp.ge.s32.totalorder %s1355, %s1352
                  %s1360 = sphi 0, %s1399
                  %s1361 = sphi %s1252, %s1402
                  %s1362 = sphi %s1263, %s1403
                $region73: #{_mlp_forward_folded.1} parent=69 // loop_header_branch
                  %1359 = sbr.rel (%p1356) target = $region77
                $region74: #{_mlp_forward_folded.1} parent=69 // loop_body
                  %v1363 = vld [vmem:[%s1361] sm:$0xff]
                  %1364 = vst [vmem:[%s1362] sm:$0xff] %v1363
                  %v1365 = vld [vmem:[%s1361 + $0x8] sm:$0xff]
                  %1366 = vst [vmem:[%s1362 + $0x8] sm:$0xff] %v1365
                  %v1367 = vld [vmem:[%s1361 + $0x10] sm:$0xff]
                  %1368 = vst [vmem:[%s1362 + $0x10] sm:$0xff] %v1367
                  %v1369 = vld [vmem:[%s1361 + $0x18] sm:$0xff]
                  %1370 = vst [vmem:[%s1362 + $0x18] sm:$0xff] %v1369
                  %v1371 = vld [vmem:[%s1361 + $0x20] sm:$0xff]
                  %1372 = vst [vmem:[%s1362 + $0x20] sm:$0xff] %v1371
                  %v1373 = vld [vmem:[%s1361 + $0x28] sm:$0xff]
                  %1374 = vst [vmem:[%s1362 + $0x28] sm:$0xff] %v1373
                  %v1375 = vld [vmem:[%s1361 + $0x30] sm:$0xff]
                  %1376 = vst [vmem:[%s1362 + $0x30] sm:$0xff] %v1375
                  %v1377 = vld [vmem:[%s1361 + $0x38] sm:$0xff]
                  %1378 = vst [vmem:[%s1362 + $0x38] sm:$0xff] %v1377
                  %v1379 = vld [vmem:[%s1361 + $0x40] sm:$0xff]
                  %1380 = vst [vmem:[%s1362 + $0x40] sm:$0xff] %v1379
                  %v1381 = vld [vmem:[%s1361 + $0x48] sm:$0xff]
                  %1382 = vst [vmem:[%s1362 + $0x48] sm:$0xff] %v1381
                  %v1383 = vld [vmem:[%s1361 + $0x50] sm:$0xff]
                  %1384 = vst [vmem:[%s1362 + $0x50] sm:$0xff] %v1383
                  %v1385 = vld [vmem:[%s1361 + $0x58] sm:$0xff]
                  %1386 = vst [vmem:[%s1362 + $0x58] sm:$0xff] %v1385
                  %v1387 = vld [vmem:[%s1361 + $0x60] sm:$0xff]
                  %1388 = vst [vmem:[%s1362 + $0x60] sm:$0xff] %v1387
                  %v1389 = vld [vmem:[%s1361 + $0x68] sm:$0xff]
                  %1390 = vst [vmem:[%s1362 + $0x68] sm:$0xff] %v1389
                  %v1391 = vld [vmem:[%s1361 + $0x70] sm:$0xff]
                  %1392 = vst [vmem:[%s1362 + $0x70] sm:$0xff] %v1391
                  %v1393 = vld [vmem:[%s1361 + $0x78] sm:$0xff]
                  %1394 = vst [vmem:[%s1362 + $0x78] sm:$0xff] %v1393
                  %v1395 = vld [vmem:[%s1361 + $0x80] sm:$0xff]
                  %1396 = vst [vmem:[%s1362 + $0x80] sm:$0xff] %v1395
                  %s1397 = sadd.s32 1, %s1360
                  %p1398 = scmp.ge.s32.totalorder %s1397, %s1352
                  %s1399 = scalar_select %p1398, 0, %s1397
                  %s1400 = smul.u32 %s1399, 136
                  %s1401 = smul.u32 %s1399, 136
                  %s1402 = scalar_lea.vmem %s1252, %s1400 [#allocation2]
                  %s1403 = scalar_lea.vmem %s1263, %s1401
                $region75: #{_mlp_forward_folded.1} parent=69 // loop_footer
                  %s1357 = sadd.s32 %s1355, 1
                $region76: #{_mlp_forward_folded.1} parent=69 // loop_footer_branch
                  %1354 = sbr.rel target = $region72
                $region77: #{_mlp_forward_folded.1} parent=69 // loop_exit
                  _
                %s1404 = sdiv.u32.pop %s1259, 17
                %s1405 = srem.u32.pop %s1259, 17
                %s1406 = smul.u32 %s1404, 17
                %s1407 = smul.u32 8, %s1406
                %s1408 = scalar_lea.vmem %s1252, %s1407 [#allocation2]
                %s1409 = smul.u32 8, %s1406
                %s1410 = scalar_lea.vmem %s1263, %s1409
                // While loop
                $region78: #{_mlp_forward_folded.1} parent=69 // loop_pre_header
                  _
                $region79: #{_mlp_forward_folded.1} parent=69 // loop_header
                  %s1412 = sphi 0, %s1414
                  %p1413 = scmp.ge.s32.totalorder %s1412, %s1405
                  %s1417 = sphi 0, %s1424
                  %s1418 = sphi %s1408, %s1427
                  %s1419 = sphi %s1410, %s1428
                $region80: #{_mlp_forward_folded.1} parent=69 // loop_header_branch
                  %1416 = sbr.rel (%p1413) target = $region84
                $region81: #{_mlp_forward_folded.1} parent=69 // loop_body
                  %v1420 = vld [vmem:[%s1418] sm:$0xff]
                  %1421 = vst [vmem:[%s1419] sm:$0xff] %v1420
                  %s1422 = sadd.s32 1, %s1417
                  %p1423 = scmp.ge.s32.totalorder %s1422, %s1405
                  %s1424 = scalar_select %p1423, 0, %s1422
                  %s1425 = smul.u32 %s1424, 8
                  %s1426 = smul.u32 %s1424, 8
                  %s1427 = scalar_lea.vmem %s1408, %s1425 [#allocation2]
                  %s1428 = scalar_lea.vmem %s1410, %s1426
                $region82: #{_mlp_forward_folded.1} parent=69 // loop_footer
                  %s1414 = sadd.s32 %s1412, 1
                $region83: #{_mlp_forward_folded.1} parent=69 // loop_footer_branch
                  %1411 = sbr.rel target = $region79
                $region84: #{_mlp_forward_folded.1} parent=69 // loop_exit
                  _
              $region70: #{_mlp_forward_folded.1} parent=47 // pred_fallthru
                _
              // Predicated region
              $region85: #{_mlp_forward_folded.1} parent=47 // pred_check
                _
              $region86: #{_mlp_forward_folded.1} parent=47 // pred_check_branch
                %1430 = sbr.rel target = $region88
              $region87: #{_mlp_forward_folded.1} parent=47 // pred_region
                _
              $region88: #{_mlp_forward_folded.1} parent=47 // pred_fallthru
                _
            $region48: #{_mlp_forward_folded.1} parent=43 // pred_fallthru
              _
            // Predicated region
            $region49: #{_mlp_forward_folded.1} parent=43 // pred_check
              _
            $region50: #{_mlp_forward_folded.1} parent=43 // pred_check_branch
              %1270 = sbr.rel target = $region52
            $region51: #{_mlp_forward_folded.1} parent=43 // pred_region
              %s1272 = ssub.s32 256, 1
              %s1273 = sdiv.u32.pop %s1259, 17
              %s1274 = srem.u32.pop %s1259, 17
              // While loop
              $region53: #{_mlp_forward_folded.1} parent=51 // loop_pre_header
                _
              $region54: #{_mlp_forward_folded.1} parent=51 // loop_header
                %s1276 = sphi 0, %s1278
                %p1277 = scmp.ge.s32.totalorder %s1276, %s1273
                %s1281 = sphi 0, %s1320
                %s1282 = sphi %s1252, %s1323
                %s1283 = sphi %s1263, %s1324
              $region55: #{_mlp_forward_folded.1} parent=51 // loop_header_branch
                %1280 = sbr.rel (%p1277) target = $region59
              $region56: #{_mlp_forward_folded.1} parent=51 // loop_body
                %v1284 = vld [vmem:[%s1282] sm:%s1272]
                %1285 = vst [vmem:[%s1283] sm:%s1272] %v1284
                %v1286 = vld [vmem:[%s1282 + $0x8] sm:%s1272]
                %1287 = vst [vmem:[%s1283 + $0x8] sm:%s1272] %v1286
                %v1288 = vld [vmem:[%s1282 + $0x10] sm:%s1272]
                %1289 = vst [vmem:[%s1283 + $0x10] sm:%s1272] %v1288
                %v1290 = vld [vmem:[%s1282 + $0x18] sm:%s1272]
                %1291 = vst [vmem:[%s1283 + $0x18] sm:%s1272] %v1290
                %v1292 = vld [vmem:[%s1282 + $0x20] sm:%s1272]
                %1293 = vst [vmem:[%s1283 + $0x20] sm:%s1272] %v1292
                %v1294 = vld [vmem:[%s1282 + $0x28] sm:%s1272]
                %1295 = vst [vmem:[%s1283 + $0x28] sm:%s1272] %v1294
                %v1296 = vld [vmem:[%s1282 + $0x30] sm:%s1272]
                %1297 = vst [vmem:[%s1283 + $0x30] sm:%s1272] %v1296
                %v1298 = vld [vmem:[%s1282 + $0x38] sm:%s1272]
                %1299 = vst [vmem:[%s1283 + $0x38] sm:%s1272] %v1298
                %v1300 = vld [vmem:[%s1282 + $0x40] sm:%s1272]
                %1301 = vst [vmem:[%s1283 + $0x40] sm:%s1272] %v1300
                %v1302 = vld [vmem:[%s1282 + $0x48] sm:%s1272]
                %1303 = vst [vmem:[%s1283 + $0x48] sm:%s1272] %v1302
                %v1304 = vld [vmem:[%s1282 + $0x50] sm:%s1272]
                %1305 = vst [vmem:[%s1283 + $0x50] sm:%s1272] %v1304
                %v1306 = vld [vmem:[%s1282 + $0x58] sm:%s1272]
                %1307 = vst [vmem:[%s1283 + $0x58] sm:%s1272] %v1306
                %v1308 = vld [vmem:[%s1282 + $0x60] sm:%s1272]
                %1309 = vst [vmem:[%s1283 + $0x60] sm:%s1272] %v1308
                %v1310 = vld [vmem:[%s1282 + $0x68] sm:%s1272]
                %1311 = vst [vmem:[%s1283 + $0x68] sm:%s1272] %v1310
                %v1312 = vld [vmem:[%s1282 + $0x70] sm:%s1272]
                %1313 = vst [vmem:[%s1283 + $0x70] sm:%s1272] %v1312
                %v1314 = vld [vmem:[%s1282 + $0x78] sm:%s1272]
                %1315 = vst [vmem:[%s1283 + $0x78] sm:%s1272] %v1314
                %v1316 = vld [vmem:[%s1282 + $0x80] sm:%s1272]
                %1317 = vst [vmem:[%s1283 + $0x80] sm:%s1272] %v1316
                %s1318 = sadd.s32 1, %s1281
                %p1319 = scmp.ge.s32.totalorder %s1318, %s1273
                %s1320 = scalar_select %p1319, 0, %s1318
                %s1321 = smul.u32 %s1320, 136
                %s1322 = smul.u32 %s1320, 136
                %s1323 = scalar_lea.vmem %s1252, %s1321 [#allocation2]
                %s1324 = scalar_lea.vmem %s1263, %s1322
              $region57: #{_mlp_forward_folded.1} parent=51 // loop_footer
                %s1278 = sadd.s32 %s1276, 1
              $region58: #{_mlp_forward_folded.1} parent=51 // loop_footer_branch
                %1275 = sbr.rel target = $region54
              $region59: #{_mlp_forward_folded.1} parent=51 // loop_exit
                _
              %s1325 = sdiv.u32.pop %s1259, 17
              %s1326 = srem.u32.pop %s1259, 17
              %s1327 = smul.u32 %s1325, 17
              %s1328 = smul.u32 8, %s1327
              %s1329 = scalar_lea.vmem %s1252, %s1328 [#allocation2]
              %s1330 = smul.u32 8, %s1327
              %s1331 = scalar_lea.vmem %s1263, %s1330
              // While loop
              $region60: #{_mlp_forward_folded.1} parent=51 // loop_pre_header
                _
              $region61: #{_mlp_forward_folded.1} parent=51 // loop_header
                %s1333 = sphi 0, %s1335
                %p1334 = scmp.ge.s32.totalorder %s1333, %s1326
                %s1338 = sphi 0, %s1345
                %s1339 = sphi %s1329, %s1348
                %s1340 = sphi %s1331, %s1349
              $region62: #{_mlp_forward_folded.1} parent=51 // loop_header_branch
                %1337 = sbr.rel (%p1334) target = $region66
              $region63: #{_mlp_forward_folded.1} parent=51 // loop_body
                %v1341 = vld [vmem:[%s1339] sm:%s1272]
                %1342 = vst [vmem:[%s1340] sm:%s1272] %v1341
                %s1343 = sadd.s32 1, %s1338
                %p1344 = scmp.ge.s32.totalorder %s1343, %s1326
                %s1345 = scalar_select %p1344, 0, %s1343
                %s1346 = smul.u32 %s1345, 8
                %s1347 = smul.u32 %s1345, 8
                %s1348 = scalar_lea.vmem %s1329, %s1346 [#allocation2]
                %s1349 = scalar_lea.vmem %s1331, %s1347
              $region64: #{_mlp_forward_folded.1} parent=51 // loop_footer
                %s1335 = sadd.s32 %s1333, 1
              $region65: #{_mlp_forward_folded.1} parent=51 // loop_footer_branch
                %1332 = sbr.rel target = $region61
              $region66: #{_mlp_forward_folded.1} parent=51 // loop_exit
                _
            $region52: #{_mlp_forward_folded.1} parent=43 // pred_fallthru
              _
          $region44: #{_mlp_forward_folded.1} parent=39 // pred_fallthru
            _
          %1431 = vnop
        $region40: #{_mlp_forward_folded.1} parent=35 // pred_fallthru
          _
      $region36: #{_mlp_forward_folded.1} parent=5 // pred_fallthru
        _
      %p1432 = scmp.le.s32.totalorder 2, %s10
      // Predicated region
      $region89: #{_mlp_forward_folded.1} parent=5 // pred_check
        %p1433 = pneg %p1432
      $region90: #{_mlp_forward_folded.1} parent=5 // pred_check_branch
        %1435 = sbr.rel (%p1433) target = $region92
      $region91: #{_mlp_forward_folded.1} parent=5 // pred_region
        %s1436 = ssub.s32 %s10, 2
        // Predicated region
        $region93: #{_mlp_forward_folded.1} parent=91 // pred_check
          %p1437 = pneg %p128
        $region94: #{_mlp_forward_folded.1} parent=91 // pred_check_branch
          %1439 = sbr.rel (%p1437) target = $region96
        $region95: #{_mlp_forward_folded.1} parent=91 // pred_region
          %s1440 = sand.u32 %s113, 1
          %s1441 = sand.u32 %s113, 1
          %s1442 = smul.addr %s1441, 136
          %s1443 = scalar_lea.vmem [#allocation2], %s1442
        $region96: #{_mlp_forward_folded.1} parent=91 // pred_fallthru
          _
      $region92: #{_mlp_forward_folded.1} parent=5 // pred_fallthru
        _
    $region6: #{_mlp_forward_folded.1} parent=1 // loop_footer
      %s14 = sadd.s32 1, %s10
    $region7: #{_mlp_forward_folded.1} parent=1 // loop_footer_branch
      %9 = sbr.rel target = $region3
    $region8: #{_mlp_forward_folded.1} parent=1 // loop_exit
      _

</llo_original>
